<compile_context>
chip_gen: v7x
topology: tpu7x:2x2x1
jax: 0.10.0
libtpu: 0.0.40
codegen_flags: <defaults>
</compile_context>

<pallas_src>
import functools

import jax
import jax.numpy as jnp
import numpy as np
from jax.experimental import pallas as pl
from jax.experimental.pallas import tpu as pltpu


# ----------------------------- Pallas kernel ------------------------------ #
def _rotary_qk_interleaved_kernel(q_ref, k_ref, cos_ref, sin_ref, oq_ref, ok_ref,
                                  *, nheads):
    # q_ref/k_ref/oq_ref/ok_ref: (TILE_S, H*D)  -- one batch slice, one seq tile
    # cos_ref: (TILE_S, D) f32, per-pair repeated cos (passthrough lanes == 1.0)
    # sin_ref: (TILE_S, D) f32, sign-folded sin: lane 2i -> -sin[i], 2i+1 -> +sin[i]
    cos_d = cos_ref[...]
    sin_d = sin_ref[...]
    if nheads > 1:
        # Replicate across heads in VMEM/vregs (cheap lane-dim concat) instead of
        # streaming an (S, H*D) f32 table from HBM.
        cos = jnp.concatenate([cos_d] * nheads, axis=1)
        sin = jnp.concatenate([sin_d] * nheads, axis=1)
    else:
        cos, sin = cos_d, sin_d
    hd = cos.shape[-1]

    # Parity mask built once per grid step at (1, HD); broadcast over sublanes below.
    lane = jax.lax.broadcasted_iota(jnp.int32, (1, hd), 1)
    even = (lane & 1) == 0

    def rotate(x_ref, o_ref):
        x = x_ref[...]                                 # native dtype (bf16 stays packed)
        # roll semantics follow jnp.roll: roll(x, s)[k] = x[(k - s) % HD]
        x_next = pltpu.roll(x, shift=hd - 1, axis=1)   # x[(k + 1) % hd]
        x_prev = pltpu.roll(x, shift=1, axis=1)        # x[(k - 1) % hd]
        # pair swap: swap[2i] = x[2i+1], swap[2i+1] = x[2i]; even lanes only read +1,
        # odd lanes only read -1, so head boundaries / the circular wrap are never hit.
        x_swap = jnp.where(even, x_next, x_prev)
        xf = x.astype(jnp.float32)
        sf = x_swap.astype(jnp.float32)
        # out[2i]   = x[2i]*cos[i] - x[2i+1]*sin[i]
        # out[2i+1] = x[2i+1]*cos[i] + x[2i]*sin[i]       (sign folded into `sin`)
        o_ref[...] = (xf * cos + sf * sin).astype(o_ref.dtype)

    rotate(q_ref, oq_ref)
    rotate(k_ref, ok_ref)


# ------------------------------- Wrapper ----------------------------------- #
def _vmem_budget_bytes():
    """Generation-aware (tile_budget, vmem_limit) in bytes."""
    cap = 64 * 1024 * 1024
    try:
        info = pltpu.get_tpu_info()
        cap = getattr(info, "vmem_capacity_bytes", cap) or cap
    except Exception:
        pass
    if cap >= 96 * 1024 * 1024:            # v5e / v6e: 128 MiB VMEM per core
        return 72 * 1024 * 1024, 100 * 1024 * 1024
    return 24 * 1024 * 1024, 48 * 1024 * 1024   # v7x: 64 MiB VMEM per TensorCore


def _choose_tile_s(S, B, hd, d, itemsize, budget):
    # Double-buffered q/k in + q/k out (x dtype) and the small (tile_s, D) f32 tables.
    per_row = 8 * hd * itemsize + 16 * d
    max_rows = max(8, budget // per_row)
    if S <= max_rows:
        tile_s = S
    else:
        # Multiple of 16 keeps sublane alignment for both f32 and bf16 tiles.
        tile_s = max(16, (max_rows // 16) * 16)
    # Megacore balance (v7x has 2 TCs): make sure there are >= 2 grid blocks when
    # the problem is big enough to care.
    if B * pl.cdiv(S, tile_s) < 2 and S >= 32:
        tile_s = max(16, ((S + 1) // 2 + 15) // 16 * 16)
    return tile_s


def _expand_rotary_tables(cos, sin, head_dim):
    """(seqlen_ro, rotary_dim//2) -> pair-expanded, sign-folded f32 tables of
    shape (seqlen_ro, head_dim):
        cos_rep[s, 2i] = cos_rep[s, 2i+1] = cos[s, i]   (1.0 on passthrough lanes)
        sin_signed[s, 2i] = -sin[s, i], sin_signed[s, 2i+1] = +sin[s, i]  (0.0 pads)
    """
    seqlen_ro, half = cos.shape
    rotary_dim = 2 * half
    assert rotary_dim <= head_dim, "rotary_dim must be <= headdim"
    cos32 = cos.astype(jnp.float32)
    sin32 = sin.astype(jnp.float32)
    cos_rep = jnp.repeat(cos32, 2, axis=-1)
    sin_signed = jnp.stack([-sin32, sin32], axis=-1).reshape(seqlen_ro, rotary_dim)
    if rotary_dim < head_dim:
        pad = head_dim - rotary_dim
        cos_rep = jnp.concatenate(
            [cos_rep, jnp.ones((seqlen_ro, pad), jnp.float32)], axis=-1)
        sin_signed = jnp.concatenate(
            [sin_signed, jnp.zeros((seqlen_ro, pad), jnp.float32)], axis=-1)
    return cos_rep, sin_signed


def _apply_rotary_prepared(q, k, cos_rep, sin_signed, *, inplace=False):
    """q, k: (B, S, H, D); cos_rep/sin_signed: (seqlen_ro, D) f32 expanded tables."""
    B, S, H, D = q.shape
    assert k.shape == q.shape, "q and k must have the same shape"
    seqlen_ro, d_tab = cos_rep.shape
    assert d_tab == D, "expanded tables must match headdim"
    assert seqlen_ro >= S, "seqlen_ro must be >= seqlen"

    HD = H * D
    q2 = q.reshape(B, S, HD)   # free reshape, no HBM transpose
    k2 = k.reshape(B, S, HD)

    budget, vmem_limit = _vmem_budget_bytes()
    tile_s = _choose_tile_s(S, B, HD, D, jnp.dtype(q.dtype).itemsize, budget)
    grid_s = pl.cdiv(S, tile_s)

    # NOTE: H*D >= 128 keeps output stores lane-dense (unmasked vst); smaller configs
    # still run correctly but hit masked partial stores.
    qk_spec = pl.BlockSpec((pl.Squeezed(), tile_s, HD), lambda s, b: (b, s, 0))
    cs_spec = pl.BlockSpec((tile_s, D), lambda s, b: (s, 0))  # constant over inner b axis

    kernel = functools.partial(_rotary_qk_interleaved_kernel, nheads=H)
    alias = {0: 0, 1: 1} if inplace else {}

    oq, ok = pl.pallas_call(
        kernel,
        out_shape=(jax.ShapeDtypeStruct((B, S, HD), q.dtype),
                   jax.ShapeDtypeStruct((B, S, HD), k.dtype)),
        grid=(grid_s, B),
        in_specs=[qk_spec, qk_spec, cs_spec, cs_spec],
        out_specs=(qk_spec, qk_spec),
        input_output_aliases=alias,
        compiler_params=pltpu.CompilerParams(
            dimension_semantics=("parallel", "parallel"),
            vmem_limit_bytes=vmem_limit,
        ),
    )(q2, k2, cos_rep, sin_signed)

    return oq.reshape(B, S, H, D), ok.reshape(B, S, H, D)


def apply_rotary_emb_qk_interleaved(q, k, cos, sin, *, inplace=False):
    """q, k: (B, S, H, D); cos, sin: (seqlen_ro, rotary_dim // 2). Returns (q_rot, k_rot)."""
    D = q.shape[-1]
    cos_rep, sin_signed = _expand_rotary_tables(cos, sin, D)
    return _apply_rotary_prepared(q, k, cos_rep, sin_signed, inplace=inplace)


# --------------------------- Module equivalent ------------------------------ #
class RotaryEmbedding:
    """JAX/Pallas equivalent of the PyTorch RotaryEmbedding module."""

    def __init__(self, dim: int, seq_len: int, base: int = 10000):
        assert dim % 2 == 0, f"dim {dim} must be even"
        theta = 1.0 / (base ** (jnp.arange(0, dim, 2, dtype=jnp.float32) / dim))
        seq_idx = jnp.arange(seq_len, dtype=jnp.float32)
        idx_theta = jnp.einsum("i,j->ij", seq_idx, theta)    # (seq_len, dim//2)
        self.cos_cached = jnp.cos(idx_theta)                 # kept in float32
        self.sin_cached = jnp.sin(idx_theta)
        self.dim = dim
        self.seq_len = seq_len
        self.interleaved = True
        # Precompute the expanded / sign-folded kernel tables ONCE (hot-path: zero
        # per-call table construction, tables streamed at (seq_len, dim) not (S, H*D)).
        self._cos_rep, self._sin_signed = _expand_rotary_tables(
            self.cos_cached, self.sin_cached, dim)

    def forward(self, x):
        # Matches the PyTorch module: returns caches cast to x.dtype.
        return (self.cos_cached.astype(x.dtype), self.sin_cached.astype(x.dtype))

    def apply_rotary(self, q, k, *, inplace=False):
        # Pass the precomputed float32 tables directly to the kernel.
        return _apply_rotary_prepared(q, k, self._cos_rep, self._sin_signed,
                                      inplace=inplace)


# ------------------------------- Reference ---------------------------------- #
def _rotary_ref(x, cos, sin):
    B, S, H, D = x.shape
    half = cos.shape[1]
    x_rot = x[..., : 2 * half].reshape(B, S, H, half, 2)
    xe, xo = x_rot[..., 0], x_rot[..., 1]
    c = cos[:S][None, :, None, :].astype(jnp.float32)
    s = sin[:S][None, :, None, :].astype(jnp.float32)
    oe = xe * c - xo * s
    oo = xe * s + xo * c
    out_rot = jnp.stack([oe, oo], axis=-1).reshape(B, S, H, 2 * half)
    return jnp.concatenate([out_rot, x[..., 2 * half:].astype(jnp.float32)],
                           axis=-1).astype(x.dtype)


if __name__ == "__main__":
    B, S, H, D = 2, 8, 4, 32        # batch, seqlen, nheads, headdim  (H*D = 128 lanes)
    rope = RotaryEmbedding(dim=D, seq_len=S)

    key = jax.random.PRNGKey(0)
    kq, kk = jax.random.split(key)
    q = jax.random.normal(kq, (B, S, H, D), dtype=jnp.float32)
    k = jax.random.normal(kk, (B, S, H, D), dtype=jnp.float32)

    # forward(): returns the cos/sin caches (seq_len, dim/2) in x.dtype
    cos, sin = rope.forward(q)
    assert cos.shape == (S, D // 2) and sin.shape == (S, D // 2)

    # apply_rotary(): interleaved RoPE on q and k via one fused Pallas call
    q_rot, k_rot = rope.apply_rotary(q, k)
    jax.block_until_ready((q_rot, k_rot))

    q_ref = _rotary_ref(q, rope.cos_cached, rope.sin_cached)
    k_ref = _rotary_ref(k, rope.cos_cached, rope.sin_cached)
    np.testing.assert_allclose(np.asarray(q_rot), np.asarray(q_ref), atol=1e-5, rtol=1e-5)
    np.testing.assert_allclose(np.asarray(k_rot), np.asarray(k_ref), atol=1e-5, rtol=1e-5)

    # Extra check: partial rotary (rotary_dim < headdim) + bf16 inputs through the
    # same fused kernel path.
    half = D // 4
    cos_p = rope.cos_cached[:, :half]
    sin_p = rope.sin_cached[:, :half]
    qb = q.astype(jnp.bfloat16)
    kb = k.astype(jnp.bfloat16)
    qb_rot, kb_rot = apply_rotary_emb_qk_interleaved(qb, kb, cos_p, sin_p)
    jax.block_until_ready((qb_rot, kb_rot))
    qb_ref = _rotary_ref(qb, cos_p, sin_p)
    kb_ref = _rotary_ref(kb, cos_p, sin_p)
    np.testing.assert_allclose(np.asarray(qb_rot).astype(np.float32),
                               np.asarray(qb_ref).astype(np.float32), atol=2e-2, rtol=2e-2)
    np.testing.assert_allclose(np.asarray(kb_rot).astype(np.float32),
                               np.asarray(kb_ref).astype(np.float32), atol=2e-2, rtol=2e-2)

    print("KERNEL_OK")
</pallas_src>

<mosaic_0001>
module attributes {stable_mosaic.version = 11 : i64} {
  func.func @_rotary_qk_interleaved_kernel(%arg0: i32, %arg1: i32, %arg2: memref<1x8x128xf32, #tpu.memory_space<vmem>>, %arg3: memref<1x8x128xf32, #tpu.memory_space<vmem>>, %arg4: memref<8x32xf32, #tpu.memory_space<vmem>>, %arg5: memref<8x32xf32, #tpu.memory_space<vmem>>, %arg6: memref<1x8x128xf32, #tpu.memory_space<vmem>>, %arg7: memref<1x8x128xf32, #tpu.memory_space<vmem>>) attributes {dimension_semantics = [#tpu.dimension_semantics<parallel>, #tpu.dimension_semantics<parallel>], iteration_bounds = array<i64: 1, 2>, scalar_prefetch = 0 : i64, scratch_operands = 0 : i64, tpu.core_type = #tpu.core_type<tc>, window_params = [{transform_indices = @transform_0, window_bounds = array<i64: 1, 8, 128>}, {transform_indices = @transform_1, window_bounds = array<i64: 1, 8, 128>}, {transform_indices = @transform_2, window_bounds = array<i64: 8, 32>}, {transform_indices = @transform_3, window_bounds = array<i64: 8, 32>}, {transform_indices = @transform_4, window_bounds = array<i64: 1, 8, 128>}, {transform_indices = @transform_5, window_bounds = array<i64: 1, 8, 128>}]} {
    %c0 = arith.constant 0 : index
    %c0_0 = arith.constant 0 : index
    %0 = vector.load %arg4[%c0, %c0_0] : memref<8x32xf32, #tpu.memory_space<vmem>>, vector<8x32xf32>
    %c0_1 = arith.constant 0 : index
    %c0_2 = arith.constant 0 : index
    %1 = vector.load %arg5[%c0_1, %c0_2] : memref<8x32xf32, #tpu.memory_space<vmem>>, vector<8x32xf32>
    %2 = tpu.concatenate %0, %0, %0, %0 in 1 : vector<8x32xf32>, vector<8x32xf32>, vector<8x32xf32>, vector<8x32xf32> -> vector<8x128xf32>
    %3 = tpu.concatenate %1, %1, %1, %1 in 1 : vector<8x32xf32>, vector<8x32xf32>, vector<8x32xf32>, vector<8x32xf32> -> vector<8x128xf32>
    %4 = tpu.iota {dimensions = array<i32: 1>} : vector<1x128xi32>
    %c1_i32 = arith.constant 1 : i32
    %5 = vector.broadcast %c1_i32 : i32 to vector<1x128xi32>
    %6 = arith.andi %4, %5 : vector<1x128xi32>
    %c0_i32 = arith.constant 0 : i32
    %7 = vector.broadcast %c0_i32 : i32 to vector<1x128xi32>
    %8 = arith.cmpi eq, %6, %7 : vector<1x128xi32>
    %c0_3 = arith.constant 0 : index
    %c0_4 = arith.constant 0 : index
    %c0_5 = arith.constant 0 : index
    %9 = vector.load %arg2[%c0_3, %c0_4, %c0_5] : memref<1x8x128xf32, #tpu.memory_space<vmem>>, vector<1x8x128xf32>
    %10 = vector.shape_cast %9 : vector<1x8x128xf32> to vector<8x128xf32>
    %c127_i32 = arith.constant 127 : i32
    %11 = tpu.dynamic_rotate %10 by %c127_i32 dim 1 : vector<8x128xf32>, i32 -> vector<8x128xf32>
    %c1_i32_6 = arith.constant 1 : i32
    %12 = tpu.dynamic_rotate %10 by %c1_i32_6 dim 1 : vector<8x128xf32>, i32 -> vector<8x128xf32>
    %13 = vector.shape_cast %8 : vector<1x128xi1> to vector<1x128xi1>
    %14 = vector.broadcast %13 : vector<1x128xi1> to vector<8x128xi1>
    %15 = arith.select %14, %11, %12 : vector<8x128xi1>, vector<8x128xf32>
    %16 = arith.mulf %10, %2 : vector<8x128xf32>
    %17 = arith.mulf %15, %3 : vector<8x128xf32>
    %18 = arith.addf %16, %17 : vector<8x128xf32>
    %c0_7 = arith.constant 0 : index
    %c0_8 = arith.constant 0 : index
    %c0_9 = arith.constant 0 : index
    %19 = vector.load %arg6[%c0_7, %c0_8, %c0_9] : memref<1x8x128xf32, #tpu.memory_space<vmem>>, vector<1x8x128xf32>
    %20 = vector.shape_cast %19 : vector<1x8x128xf32> to vector<8x128xf32>
    %21 = vector.shape_cast %18 : vector<8x128xf32> to vector<1x8x128xf32>
    tpu.vector_store %arg6[%c0_7, %c0_8, %c0_9], %21 {strides = array<i32>} : memref<1x8x128xf32, #tpu.memory_space<vmem>>, vector<1x8x128xf32>,
    %c0_10 = arith.constant 0 : index
    %c0_11 = arith.constant 0 : index
    %c0_12 = arith.constant 0 : index
    %22 = vector.load %arg3[%c0_10, %c0_11, %c0_12] : memref<1x8x128xf32, #tpu.memory_space<vmem>>, vector<1x8x128xf32>
    %23 = vector.shape_cast %22 : vector<1x8x128xf32> to vector<8x128xf32>
    %c127_i32_13 = arith.constant 127 : i32
    %24 = tpu.dynamic_rotate %23 by %c127_i32_13 dim 1 : vector<8x128xf32>, i32 -> vector<8x128xf32>
    %c1_i32_14 = arith.constant 1 : i32
    %25 = tpu.dynamic_rotate %23 by %c1_i32_14 dim 1 : vector<8x128xf32>, i32 -> vector<8x128xf32>
    %26 = vector.shape_cast %8 : vector<1x128xi1> to vector<1x128xi1>
    %27 = vector.broadcast %26 : vector<1x128xi1> to vector<8x128xi1>
    %28 = arith.select %27, %24, %25 : vector<8x128xi1>, vector<8x128xf32>
    %29 = arith.mulf %23, %2 : vector<8x128xf32>
    %30 = arith.mulf %28, %3 : vector<8x128xf32>
    %31 = arith.addf %29, %30 : vector<8x128xf32>
    %c0_15 = arith.constant 0 : index
    %c0_16 = arith.constant 0 : index
    %c0_17 = arith.constant 0 : index
    %32 = vector.load %arg7[%c0_15, %c0_16, %c0_17] : memref<1x8x128xf32, #tpu.memory_space<vmem>>, vector<1x8x128xf32>
    %33 = vector.shape_cast %32 : vector<1x8x128xf32> to vector<8x128xf32>
    %34 = vector.shape_cast %31 : vector<8x128xf32> to vector<1x8x128xf32>
    tpu.vector_store %arg7[%c0_15, %c0_16, %c0_17], %34 {strides = array<i32>} : memref<1x8x128xf32, #tpu.memory_space<vmem>>, vector<1x8x128xf32>,
    return
  }
  func.func @transform_0(%arg0: i32, %arg1: i32) -> (i32, i32, i32) {
    %c0_i32 = arith.constant 0 : i32
    %c0_i32_0 = arith.constant 0 : i32
    return %arg1, %arg0, %c0_i32 : i32, i32, i32
  }
  func.func @transform_1(%arg0: i32, %arg1: i32) -> (i32, i32, i32) {
    %c0_i32 = arith.constant 0 : i32
    %c0_i32_0 = arith.constant 0 : i32
    return %arg1, %arg0, %c0_i32 : i32, i32, i32
  }
  func.func @transform_2(%arg0: i32, %arg1: i32) -> (i32, i32) {
    %c0_i32 = arith.constant 0 : i32
    %c0_i32_0 = arith.constant 0 : i32
    return %arg0, %c0_i32 : i32, i32
  }
  func.func @transform_3(%arg0: i32, %arg1: i32) -> (i32, i32) {
    %c0_i32 = arith.constant 0 : i32
    %c0_i32_0 = arith.constant 0 : i32
    return %arg0, %c0_i32 : i32, i32
  }
  func.func @transform_4(%arg0: i32, %arg1: i32) -> (i32, i32, i32) {
    %c0_i32 = arith.constant 0 : i32
    %c0_i32_0 = arith.constant 0 : i32
    return %arg1, %arg0, %c0_i32 : i32, i32, i32
  }
  func.func @transform_5(%arg0: i32, %arg1: i32) -> (i32, i32, i32) {
    %c0_i32 = arith.constant 0 : i32
    %c0_i32_0 = arith.constant 0 : i32
    return %arg1, %arg0, %c0_i32 : i32, i32, i32
  }
}

</mosaic_0001>

<llo_original>
// kernel: tpu_custom_call.1
$region0: #{tpu_custom_call.1}
  #allocation0 [shape = 'u32[]', space=smem, size = 0x4, offset = 0x4, fixed_abs, tag = 'smem constant byte address 0x4 - core index']
  #allocation1 [shape = 'u32[144,128]{1,0:T(1,128)}', space=vmem, size = 0x12000, scoped, tag = 'internal scratch']
  %s0 = inlined_call_operand.hbm [shape: f32[2,8,128], index: 0, kind: input, shape index: {}]
  %s1 = inlined_call_operand.hbm [shape: f32[2,8,128], index: 1, kind: input, shape index: {}]
  %s2 = inlined_call_operand.hbm [shape: f32[8,32], index: 2, kind: input, shape index: {}]
  %s3 = inlined_call_operand.vmem [shape: f32[8,32], index: 3, kind: input, shape index: {}]
  %s4 = inlined_call_operand.hbm [shape: f32[2,8,128], index: 4, kind: output, shape index: {0}]
  %s5 = inlined_call_operand.hbm [shape: f32[2,8,128], index: 5, kind: output, shape index: {1}]
  %6 = xla_tuple %s4, %s5
  %s7 = sld [smem:[#allocation0]]
  $region69: #{tpu_custom_call.1} parent=0
    _
  %s9 = ssub.s32 1, %s7
  %s10 = scalar_select 0, %s9, %s7
  $region1: #{tpu_custom_call.1} parent=0
    #allocation2 [shape = 'u8[8192]{0}', space=vmem, size = 0x2000, scoped, tag = 'input window, operand 0']
    #allocation3 [shape = 's32[2]{0}', space=sflag, size = 0x8, scoped, tag = 'scoped memory for tpu_custom_call.1']
    #allocation4 [shape = 's32[2]{0}', space=sflag, size = 0x8, scoped, tag = 'scoped memory for tpu_custom_call.1']
    #allocation5 [shape = 'u8[8192]{0}', space=vmem, size = 0x2000, scoped, tag = 'input window, operand 1']
    #allocation6 [shape = 's32[2]{0}', space=sflag, size = 0x8, scoped, tag = 'scoped memory for tpu_custom_call.1']
    #allocation7 [shape = 'u8[4096]{0}', space=vmem, size = 0x1000, scoped, tag = 'input window, operand 2, single buffered']
    #allocation8 [shape = 'u8[8192]{0}', space=vmem, size = 0x2000, scoped, tag = 'output window, operand 0']
    #allocation9 [shape = 'u8[8192]{0}', space=vmem, size = 0x2000, scoped, tag = 'output window, operand 1']
    #allocation10 [shape = 's32[2]{0}', space=sflag, size = 0x8, scoped, tag = 'scoped memory for tpu_custom_call.1']
    %11 = vsyncpa [#allocation3], 0
    %s12 = scalar_lea.sflag [#allocation3], 1
    %13 = vsyncpa %s12, 0
    %14 = vsyncpa [#allocation6], 0
    %s15 = scalar_lea.sflag [#allocation6], 1
    %16 = vsyncpa %s15, 0
    %17 = vsyncpa [#allocation4], 0
    %s18 = scalar_lea.sflag [#allocation4], 1
    %19 = vsyncpa %s18, 0
    %20 = vsyncpa [#allocation10], 0
    %s21 = scalar_lea.sflag [#allocation10], 1
    %22 = vsyncpa %s21, 0
    loop: start=0, step=1, limit=4
    $region2: #{tpu_custom_call.1} parent=1 // loop_pre_header
      _
    $region3: #{tpu_custom_call.1} parent=1 // loop_header
      %s24 = sphi 0, %s28
      %p25 = scmp.ge.s32.totalorder %s24, 4
      %s31 = sphi 0, %s43
      %s32 = sphi 0, %s39
      %s33 = sphi 0, %s31
      %s34 = sphi 0, %s32
      %s35 = sphi 0, %s33
      %s36 = sphi 0, %s34
      %s48 = sphi 0, %s50
      %s51 = sphi 0, %s48
      %s52 = sphi 0, %s51
      %s68 = sphi 0, %s52
      %s76 = sphi 0, %s78
      %s79 = sphi 0, %s76
      %s80 = sphi 0, %s79
      %s96 = sphi 0, %s80
      %s102 = sphi 0, %s104
      %s105 = sphi 0, %s102
      %s106 = sphi 0, %s105
      %s122 = sphi 0, %s106
      %s128 = sphi 0, %s130
      %s131 = sphi 0, %s128
      %s132 = sphi 0, %s131
      %s148 = sphi 0, %s132
      %s156 = sphi 0, %s158
      %s159 = sphi 0, %s156
      %s160 = sphi 0, %s159
      %s176 = sphi 0, %s160
      %s184 = sphi 0, %s186
      %s187 = sphi 0, %s184
      %s188 = sphi 0, %s187
      %s204 = sphi 0, %s188
    $region4: #{tpu_custom_call.1} parent=1 // loop_header_branch
      %27 = sbr.rel (%p25) target = $region8
    $region5: #{tpu_custom_call.1} parent=1 // loop_body
      %s29 = ssub.s32 %s24, 1
      %s30 = ssub.s32 %s24, 2
      %s37 = sadd.s32 1, %s32
      %p38 = scmp.ge.s32.totalorder %s37, 2
      %s39 = scalar_select %p38, 0, %s37
      %s40 = sadd.s32 1, %s31
      %s41 = scalar_select %p38, %s40, %s31
      %p42 = scmp.ge.s32.totalorder %s41, 1
      %s43 = scalar_select %p42, 0, %s41
      %s44 = ssub.s32 %s32, %s39
      %s45 = ssub.s32 %s31, %s43
      %s46 = sor.u32 %s44, %s45
      %p47 = scmp.eq.s32.totalorder %s46, 0
      %s49 = sadd.s32 %s48, 1
      %s50 = scalar_select %p47, %s48, %s49
      %p53 = pneg %p47
      %p54 = scmp.eq.s32.totalorder %s24, 1
      %p55 = por %p53, %p54
      %p56 = scmp.ne.s32.totalorder %s48, %s51
      %p57 = scmp.eq.s32.totalorder %s24, 0
      %p58 = por %p56, %p57
      %p59 = scmp.ne.s32.totalorder %s48, %s51
      %p60 = scmp.eq.s32.totalorder %s29, 1
      %p61 = por %p59, %p60
      %p62 = scmp.ne.s32.totalorder %s51, %s52
      %p63 = scmp.eq.s32.totalorder %s29, 0
      %p64 = por %p62, %p63
      %p65 = scmp.ne.s32.totalorder %s51, %s52
      %p66 = scmp.eq.s32.totalorder %s30, 1
      %p67 = por %p65, %p66
      %p69 = scmp.ne.s32.totalorder %s52, %s68
      %p70 = scmp.eq.s32.totalorder %s30, 0
      %p71 = por %p69, %p70
      %s72 = ssub.s32 %s32, %s39
      %s73 = ssub.s32 %s31, %s43
      %s74 = sor.u32 %s72, %s73
      %p75 = scmp.eq.s32.totalorder %s74, 0
      %s77 = sadd.s32 %s76, 1
      %s78 = scalar_select %p75, %s76, %s77
      %p81 = pneg %p75
      %p82 = scmp.eq.s32.totalorder %s24, 1
      %p83 = por %p81, %p82
      %p84 = scmp.ne.s32.totalorder %s76, %s79
      %p85 = scmp.eq.s32.totalorder %s24, 0
      %p86 = por %p84, %p85
      %p87 = scmp.ne.s32.totalorder %s76, %s79
      %p88 = scmp.eq.s32.totalorder %s29, 1
      %p89 = por %p87, %p88
      %p90 = scmp.ne.s32.totalorder %s79, %s80
      %p91 = scmp.eq.s32.totalorder %s29, 0
      %p92 = por %p90, %p91
      %p93 = scmp.ne.s32.totalorder %s79, %s80
      %p94 = scmp.eq.s32.totalorder %s30, 1
      %p95 = por %p93, %p94
      %p97 = scmp.ne.s32.totalorder %s80, %s96
      %p98 = scmp.eq.s32.totalorder %s30, 0
      %p99 = por %p97, %p98
      %s100 = ssub.s32 %s31, %s43
      %p101 = scmp.eq.s32.totalorder %s100, 0
      %s103 = sadd.s32 %s102, 1
      %s104 = scalar_select %p101, %s102, %s103
      %p107 = pneg %p101
      %p108 = scmp.eq.s32.totalorder %s24, 1
      %p109 = por %p107, %p108
      %p110 = scmp.ne.s32.totalorder %s102, %s105
      %p111 = scmp.eq.s32.totalorder %s24, 0
      %p112 = por %p110, %p111
      %p113 = scmp.ne.s32.totalorder %s102, %s105
      %p114 = scmp.eq.s32.totalorder %s29, 1
      %p115 = por %p113, %p114
      %p116 = scmp.ne.s32.totalorder %s105, %s106
      %p117 = scmp.eq.s32.totalorder %s29, 0
      %p118 = por %p116, %p117
      %p119 = scmp.ne.s32.totalorder %s105, %s106
      %p120 = scmp.eq.s32.totalorder %s30, 1
      %p121 = por %p119, %p120
      %p123 = scmp.ne.s32.totalorder %s106, %s122
      %p124 = scmp.eq.s32.totalorder %s30, 0
      %p125 = por %p123, %p124
      %s126 = ssub.s32 %s31, %s43
      %p127 = scmp.eq.s32.totalorder %s126, 0
      %s129 = sadd.s32 %s128, 1
      %s130 = scalar_select %p127, %s128, %s129
      %p133 = pneg %p127
      %p134 = scmp.eq.s32.totalorder %s24, 1
      %p135 = por %p133, %p134
      %p136 = scmp.ne.s32.totalorder %s128, %s131
      %p137 = scmp.eq.s32.totalorder %s24, 0
      %p138 = por %p136, %p137
      %p139 = scmp.ne.s32.totalorder %s128, %s131
      %p140 = scmp.eq.s32.totalorder %s29, 1
      %p141 = por %p139, %p140
      %p142 = scmp.ne.s32.totalorder %s131, %s132
      %p143 = scmp.eq.s32.totalorder %s29, 0
      %p144 = por %p142, %p143
      %p145 = scmp.ne.s32.totalorder %s131, %s132
      %p146 = scmp.eq.s32.totalorder %s30, 1
      %p147 = por %p145, %p146
      %p149 = scmp.ne.s32.totalorder %s132, %s148
      %p150 = scmp.eq.s32.totalorder %s30, 0
      %p151 = por %p149, %p150
      %s152 = ssub.s32 %s32, %s39
      %s153 = ssub.s32 %s31, %s43
      %s154 = sor.u32 %s152, %s153
      %p155 = scmp.eq.s32.totalorder %s154, 0
      %s157 = sadd.s32 %s156, 1
      %s158 = scalar_select %p155, %s156, %s157
      %p161 = pneg %p155
      %p162 = scmp.eq.s32.totalorder %s24, 1
      %p163 = por %p161, %p162
      %p164 = scmp.ne.s32.totalorder %s156, %s159
      %p165 = scmp.eq.s32.totalorder %s24, 0
      %p166 = por %p164, %p165
      %p167 = scmp.ne.s32.totalorder %s156, %s159
      %p168 = scmp.eq.s32.totalorder %s29, 1
      %p169 = por %p167, %p168
      %p170 = scmp.ne.s32.totalorder %s159, %s160
      %p171 = scmp.eq.s32.totalorder %s29, 0
      %p172 = por %p170, %p171
      %p173 = scmp.ne.s32.totalorder %s159, %s160
      %p174 = scmp.eq.s32.totalorder %s30, 1
      %p175 = por %p173, %p174
      %p177 = scmp.ne.s32.totalorder %s160, %s176
      %p178 = scmp.eq.s32.totalorder %s30, 0
      %p179 = por %p177, %p178
      %s180 = ssub.s32 %s32, %s39
      %s181 = ssub.s32 %s31, %s43
      %s182 = sor.u32 %s180, %s181
      %p183 = scmp.eq.s32.totalorder %s182, 0
      %s185 = sadd.s32 %s184, 1
      %s186 = scalar_select %p183, %s184, %s185
      %p189 = pneg %p183
      %p190 = scmp.eq.s32.totalorder %s24, 1
      %p191 = por %p189, %p190
      %p192 = scmp.ne.s32.totalorder %s184, %s187
      %p193 = scmp.eq.s32.totalorder %s24, 0
      %p194 = por %p192, %p193
      %p195 = scmp.ne.s32.totalorder %s184, %s187
      %p196 = scmp.eq.s32.totalorder %s29, 1
      %p197 = por %p195, %p196
      %p198 = scmp.ne.s32.totalorder %s187, %s188
      %p199 = scmp.eq.s32.totalorder %s29, 0
      %p200 = por %p198, %p199
      %p201 = scmp.ne.s32.totalorder %s187, %s188
      %p202 = scmp.eq.s32.totalorder %s30, 1
      %p203 = por %p201, %p202
      %p205 = scmp.ne.s32.totalorder %s188, %s204
      %p206 = scmp.eq.s32.totalorder %s30, 0
      %p207 = por %p205, %p206
      %p208 = scmp.le.s32.totalorder 1, %s24
      %p209 = scmp.lt.s32.totalorder %s24, 3
      %p210 = pnand %p208, %p209
      %p211 = pneg %p210
      // Predicated region
      $region9: #{tpu_custom_call.1} parent=5 // pred_check
        _
      $region10: #{tpu_custom_call.1} parent=5 // pred_check_branch
        %213 = sbr.rel (%p210) target = $region12
      $region11: #{tpu_custom_call.1} parent=5 // pred_region
        %s214 = ssub.s32 %s24, 1
        // Predicated region
        $region13: #{tpu_custom_call.1} parent=11 // pred_check
          %p215 = pneg %p118
        $region14: #{tpu_custom_call.1} parent=11 // pred_check_branch
          %217 = sbr.rel (%p215) target = $region16
        $region15: #{tpu_custom_call.1} parent=11 // pred_region
          %s219 = ssub.s32 128, 128
          %220 = vsyncadd [#allocation6], %s219
          %s221 = smul.addr %s33, 128
          %s222 = scalar_lea.hbm %s2, %s221
          %s224 = sshll.u32 [#allocation7], 4
          %s225 = int_to_ptr.vmem [resolvable:$true] %s224
          %227 = dma.hbm_to_vmem [thread:$0]  %s222, 128, %s225, [#allocation6]
        $region16: #{tpu_custom_call.1} parent=11 // pred_fallthru
          _
        // Predicated region
        $region17: #{tpu_custom_call.1} parent=11 // pred_check
          %p228 = pneg %p144
        $region18: #{tpu_custom_call.1} parent=11 // pred_check_branch
          %230 = sbr.rel (%p228) target = $region20
        $region19: #{tpu_custom_call.1} parent=11 // pred_region
          %p231 = scmp.lt.s32.totalorder %s33, 0
          %s232 = scalar_select %p231, %s33, 0
          %s233 = smul.addr %s232, 8
          %s234 = scalar_lea.vmem %s3, %s233
        $region20: #{tpu_custom_call.1} parent=11 // pred_fallthru
          _
      $region12: #{tpu_custom_call.1} parent=5 // pred_fallthru
        _
      %p235 = scmp.lt.s32.totalorder %s24, 2
      // Predicated region
      $region21: #{tpu_custom_call.1} parent=5 // pred_check
        %p236 = pneg %p235
      $region22: #{tpu_custom_call.1} parent=5 // pred_check_branch
        %238 = sbr.rel (%p236) target = $region24
      $region23: #{tpu_custom_call.1} parent=5 // pred_region
        // Predicated region
        $region25: #{tpu_custom_call.1} parent=23 // pred_check
          %p239 = pneg %p58
        $region26: #{tpu_custom_call.1} parent=23 // pred_check_branch
          %241 = sbr.rel (%p239) target = $region28
        $region27: #{tpu_custom_call.1} parent=23 // pred_region
          %s242 = sand.u32 %s48, 1
          %s243 = scalar_lea.sflag [#allocation3], %s242
          %s244 = sand.u32 %s48, 1
          %s245 = smul.addr %s244, 8
          %s246 = scalar_lea.vmem [#allocation2], %s245
          %s248 = ssub.s32 128, 128
          %249 = vsyncadd %s243, %s248
          %s250 = sadd.s32 %s31, %s32
          %s251 = smul.addr %s250, 128
          %s252 = scalar_lea.hbm %s0, %s251
          %s254 = sshll.u32 %s246, 4
          %s255 = int_to_ptr.vmem [resolvable:$true] %s254
          %257 = dma.hbm_to_vmem [thread:$0]  %s252, 128, %s255, %s243
        $region28: #{tpu_custom_call.1} parent=23 // pred_fallthru
          _
        // Predicated region
        $region29: #{tpu_custom_call.1} parent=23 // pred_check
          %p258 = pneg %p86
        $region30: #{tpu_custom_call.1} parent=23 // pred_check_branch
          %260 = sbr.rel (%p258) target = $region32
        $region31: #{tpu_custom_call.1} parent=23 // pred_region
          %s261 = sand.u32 %s24, 1
          %s262 = scalar_lea.sflag [#allocation6], %s261
          %s263 = sand.u32 %s76, 1
          %s264 = smul.addr %s263, 8
          %s265 = scalar_lea.vmem [#allocation5], %s264
          %s267 = ssub.s32 128, 128
          %268 = vsyncadd %s262, %s267
          %s269 = sadd.s32 %s31, %s32
          %s270 = smul.addr %s269, 128
          %s271 = scalar_lea.hbm %s1, %s270
          %s273 = sshll.u32 %s265, 4
          %s274 = int_to_ptr.vmem [resolvable:$true] %s273
          %276 = dma.hbm_to_vmem [thread:$0]  %s271, 128, %s274, %s262
        $region32: #{tpu_custom_call.1} parent=23 // pred_fallthru
          _
      $region24: #{tpu_custom_call.1} parent=5 // pred_fallthru
        _
      %p277 = scmp.le.s32.totalorder 1, %s24
      %p278 = scmp.lt.s32.totalorder %s24, 3
      %p279 = pnand %p277, %p278
      %p280 = pneg %p279
      // Predicated region
      $region33: #{tpu_custom_call.1} parent=5 // pred_check
        _
      $region34: #{tpu_custom_call.1} parent=5 // pred_check_branch
        %282 = sbr.rel (%p279) target = $region36
      $region35: #{tpu_custom_call.1} parent=5 // pred_region
        %s283 = ssub.s32 %s24, 1
        %s284 = sand.u32 %s51, 1
        %s285 = scalar_lea.sflag [#allocation3], %s284
        %s286 = sand.u32 %s51, 1
        %s287 = smul.addr %s286, 8
        %s288 = scalar_lea.vmem [#allocation2], %s287
        // Predicated region
        $region37: #{tpu_custom_call.1} parent=35 // pred_check
          %p289 = pneg %p64
        $region38: #{tpu_custom_call.1} parent=35 // pred_check_branch
          %291 = sbr.rel (%p289) target = $region40
        $region39: #{tpu_custom_call.1} parent=35 // pred_region
          %292 = dma.done %s285, 128
        $region40: #{tpu_custom_call.1} parent=35 // pred_fallthru
          _
        %s293 = sand.u32 %s29, 1
        %s294 = scalar_lea.sflag [#allocation6], %s293
        %s295 = sand.u32 %s79, 1
        %s296 = smul.addr %s295, 8
        %s297 = scalar_lea.vmem [#allocation5], %s296
        // Predicated region
        $region41: #{tpu_custom_call.1} parent=35 // pred_check
          %p298 = pneg %p92
        $region42: #{tpu_custom_call.1} parent=35 // pred_check_branch
          %300 = sbr.rel (%p298) target = $region44
        $region43: #{tpu_custom_call.1} parent=35 // pred_region
          %301 = dma.done %s294, 128
        $region44: #{tpu_custom_call.1} parent=35 // pred_fallthru
          _
        // Predicated region
        $region45: #{tpu_custom_call.1} parent=35 // pred_check
          %p302 = pneg %p118
        $region46: #{tpu_custom_call.1} parent=35 // pred_check_branch
          %304 = sbr.rel (%p302) target = $region48
        $region47: #{tpu_custom_call.1} parent=35 // pred_region
          %305 = dma.done [#allocation6], 128
        $region48: #{tpu_custom_call.1} parent=35 // pred_fallthru
          _
        %s306 = sand.u32 %s51, 1
        %s307 = scalar_lea.sflag [#allocation3], %s306
        %s308 = sand.u32 %s51, 1
        %s309 = smul.addr %s308, 8
        %s310 = scalar_lea.vmem [#allocation2], %s309
        %p311 = pneg %p64
        %p312 = pneg %p61
        %s313 = sand.u32 %s29, 1
        %s314 = scalar_lea.sflag [#allocation6], %s313
        %s315 = sand.u32 %s79, 1
        %s316 = smul.addr %s315, 8
        %s317 = scalar_lea.vmem [#allocation5], %s316
        %p318 = pneg %p92
        %p319 = pneg %p89
        %p320 = pneg %p118
        %p321 = pneg %p115
        %p322 = scmp.lt.s32.totalorder %s33, 0
        %s323 = scalar_select %p322, %s33, 0
        %s324 = smul.addr %s323, 8
        %s325 = scalar_lea.vmem %s3, %s324
        %p326 = pneg %p144
        %p327 = pneg %p141
        %p328 = pneg %p172
        %p329 = pneg %p169
        %s330 = sand.u32 %s159, 1
        %s331 = scalar_lea.sflag [#allocation4], %s330
        %s332 = sand.u32 %s159, 1
        %s333 = smul.addr %s332, 8
        %s334 = scalar_lea.vmem [#allocation8], %s333
        %p335 = pneg %p200
        %p336 = pneg %p197
        %s337 = sand.u32 %s187, 1
        %s338 = scalar_lea.sflag [#allocation10], %s337
        %s339 = sand.u32 %s187, 1
        %s340 = smul.addr %s339, 8
        %s341 = scalar_lea.vmem [#allocation9], %s340
        %p342 = scmp.lt.s32.totalorder %s33, 0
        %s343 = scalar_select %p342, %s33, 0
        %s344 = smul.addr %s343, 8
        %s345 = scalar_lea.vmem %s3, %s344
        %v346 = vld [vmem:[#allocation7] sm:$0xff]
        %v347 = vld [vmem:[%s345] sm:$0xff]
        %349 = vrot.lane.b32.xlu0 %v346, 32
        %v350 = vpop.permute.xlu0 %349
        %352 = vrot.lane.b32.xlu0 %v346, 64
        %v353 = vpop.permute.xlu0 %352
        %355 = vrot.lane.b32.xlu0 %v346, 96
        %v356 = vpop.permute.xlu0 %355
        %vm358 = vcmask 261120
        %v359 = vsel %vm358, %v346, %v350
        %vm360 = vcmask 523264
        %v361 = vsel %vm360, %v359, %v353
        %vm362 = vcmask 785408
        %v363 = vsel %vm362, %v361, %v356
        %365 = vrot.lane.b32.xlu0 %v347, 32
        %v366 = vpop.permute.xlu0 %365
        %368 = vrot.lane.b32.xlu0 %v347, 64
        %v369 = vpop.permute.xlu0 %368
        %371 = vrot.lane.b32.xlu0 %v347, 96
        %v372 = vpop.permute.xlu0 %371
        %v374 = vsel %vm358, %v347, %v366
        %v375 = vsel %vm360, %v374, %v369
        %v376 = vsel %vm362, %v375, %v372
        %v377 = vlaneseq
        %v378 = vand.u32 %v377, 127
        %v379 = vand.u32 %v378, 1
        %vm380 = vcmp.eq.s32.totalorder %v379, 0
        %v381 = vld [vmem:[%s288] sm:$0xff]
        %382 = vrot.lane.b32.xlu0 %v381, 127
        %v383 = vpop.permute.xlu0 %382
        %384 = vrot.lane.b32.xlu0 %v381, 1
        %v385 = vpop.permute.xlu0 %384
        %v386 = vsel %vm380, 1, 0
        %vm387 = vcmp.eq.s32.totalorder %v386, 1
        %v388 = vsel %vm387, %v383, %v385
        %v389 = vmul.f32 %v381, %v363
        %v390 = vmul.f32 %v388, %v376
        %v391 = vadd.f32 %v389, %v390
        %392 = vst [vmem:[%s334] sm:$0xff] %v391
        %v393 = vld [vmem:[%s297] sm:$0xff]
        %394 = vrot.lane.b32.xlu0 %v393, 127
        %v395 = vpop.permute.xlu0 %394
        %396 = vrot.lane.b32.xlu0 %v393, 1
        %v397 = vpop.permute.xlu0 %396
        %v398 = vsel %vm387, %v395, %v397
        %v399 = vmul.f32 %v393, %v363
        %v400 = vmul.f32 %v398, %v376
        %v401 = vadd.f32 %v399, %v400
        %402 = vst [vmem:[%s341] sm:$0xff] %v401
        %s403 = sand.u32 %s159, 1
        %s404 = scalar_lea.sflag [#allocation4], %s403
        %s405 = sand.u32 %s159, 1
        %s406 = smul.addr %s405, 8
        %s407 = scalar_lea.vmem [#allocation8], %s406
        %s408 = sand.u32 %s187, 1
        %s409 = scalar_lea.sflag [#allocation10], %s408
        %s410 = sand.u32 %s187, 1
        %s411 = smul.addr %s410, 8
        %s412 = scalar_lea.vmem [#allocation9], %s411
        // Predicated region
        $region49: #{tpu_custom_call.1} parent=35 // pred_check
          %p413 = pneg %p169
        $region50: #{tpu_custom_call.1} parent=35 // pred_check_branch
          %415 = sbr.rel (%p413) target = $region52
        $region51: #{tpu_custom_call.1} parent=35 // pred_region
          %s417 = ssub.s32 128, 128
          %418 = vsyncadd %s404, %s417
          %s419 = sadd.s32 %s33, %s34
          %s420 = smul.addr %s419, 128
          %s421 = scalar_lea.hbm %s4, %s420
          %s423 = sshll.u32 %s407, 4
          %s424 = int_to_ptr.vmem [resolvable:$true] %s423
          %426 = dma.vmem_to_hbm [thread:$0]  %s424, 128, %s421, %s404
        $region52: #{tpu_custom_call.1} parent=35 // pred_fallthru
          _
        // Predicated region
        $region53: #{tpu_custom_call.1} parent=35 // pred_check
          %p427 = pneg %p197
        $region54: #{tpu_custom_call.1} parent=35 // pred_check_branch
          %429 = sbr.rel (%p427) target = $region56
        $region55: #{tpu_custom_call.1} parent=35 // pred_region
          %s431 = ssub.s32 128, 128
          %432 = vsyncadd %s409, %s431
          %s433 = sadd.s32 %s33, %s34
          %s434 = smul.addr %s433, 128
          %s435 = scalar_lea.hbm %s5, %s434
          %s437 = sshll.u32 %s412, 4
          %s438 = int_to_ptr.vmem [resolvable:$true] %s437
          %440 = dma.vmem_to_hbm [thread:$0]  %s438, 128, %s435, %s409
        $region56: #{tpu_custom_call.1} parent=35 // pred_fallthru
          _
      $region36: #{tpu_custom_call.1} parent=5 // pred_fallthru
        _
      %p441 = scmp.le.s32.totalorder 2, %s24
      // Predicated region
      $region57: #{tpu_custom_call.1} parent=5 // pred_check
        %p442 = pneg %p441
      $region58: #{tpu_custom_call.1} parent=5 // pred_check_branch
        %444 = sbr.rel (%p442) target = $region60
      $region59: #{tpu_custom_call.1} parent=5 // pred_region
        %s445 = ssub.s32 %s24, 2
        // Predicated region
        $region61: #{tpu_custom_call.1} parent=59 // pred_check
          %p446 = pneg %p175
        $region62: #{tpu_custom_call.1} parent=59 // pred_check_branch
          %448 = sbr.rel (%p446) target = $region64
        $region63: #{tpu_custom_call.1} parent=59 // pred_region
          %s449 = sand.u32 %s160, 1
          %s450 = scalar_lea.sflag [#allocation4], %s449
          %s451 = sand.u32 %s160, 1
          %s452 = smul.addr %s451, 8
          %s453 = scalar_lea.vmem [#allocation8], %s452
          %454 = dma.done %s450, 128
        $region64: #{tpu_custom_call.1} parent=59 // pred_fallthru
          _
        // Predicated region
        $region65: #{tpu_custom_call.1} parent=59 // pred_check
          %p455 = pneg %p203
        $region66: #{tpu_custom_call.1} parent=59 // pred_check_branch
          %457 = sbr.rel (%p455) target = $region68
        $region67: #{tpu_custom_call.1} parent=59 // pred_region
          %s458 = sand.u32 %s188, 1
          %s459 = scalar_lea.sflag [#allocation10], %s458
          %s460 = sand.u32 %s188, 1
          %s461 = smul.addr %s460, 8
          %s462 = scalar_lea.vmem [#allocation9], %s461
          %463 = dma.done %s459, 128
        $region68: #{tpu_custom_call.1} parent=59 // pred_fallthru
          _
      $region60: #{tpu_custom_call.1} parent=5 // pred_fallthru
        _
    $region6: #{tpu_custom_call.1} parent=1 // loop_footer
      %s28 = sadd.s32 1, %s24
    $region7: #{tpu_custom_call.1} parent=1 // loop_footer_branch
      %23 = sbr.rel target = $region3
    $region8: #{tpu_custom_call.1} parent=1 // loop_exit
      _
    %464 = vsyncpa [#allocation3], 1
    %s465 = scalar_lea.sflag [#allocation3], 1
    %466 = vsyncpa %s465, 1
    %467 = vsyncpa [#allocation6], 1
    %s468 = scalar_lea.sflag [#allocation6], 1
    %469 = vsyncpa %s468, 1
    %470 = vsyncpa [#allocation4], 1
    %s471 = scalar_lea.sflag [#allocation4], 1
    %472 = vsyncpa %s471, 1
    %473 = vsyncpa [#allocation10], 1
    %s474 = scalar_lea.sflag [#allocation10], 1
    %475 = vsyncpa %s474, 1

</llo_original>
